<compile_context>
chip_gen: v7x
topology: tpu7x:2x2x1
jax: 0.10.0
libtpu: 0.0.40
codegen_flags: <defaults>
</compile_context>

<pallas_src>
import jax
import jax.numpy as jnp
from jax.experimental import pallas as pl
from jax.experimental.pallas import tpu as pltpu


def _pick_tile(m, candidates, align):
    """Largest candidate tile that divides m; else full extent (== m)."""
    for t in candidates:
        if m % t == 0 and t % align == 0:
            return t
    return m


def _vmem_cap_bytes():
    """Per-chip VMEM budget with headroom (never the full physical size)."""
    try:
        phys = int(pltpu.get_tpu_info().vmem_capacity_bytes)
    except Exception:
        phys = 64 << 20  # conservative (v7x per-TC size)
    # Leave >=16 MiB headroom for compiler-internal scratch; cap at 112 MiB on
    # 128 MiB parts (v5e/v6e), ~48 MiB on 64 MiB parts (v7x).
    return max(min(phys - (16 << 20), 112 << 20), 32 << 20)


def _gram_kernel(yl_ref, ytr_ref, o_ref):
    # out_tile(tm, tn) = y_rows(tm, K) @ yT_cols(K, tn).
    # Contraction is on the last dim of the LHS and the first dim of the RHS,
    # so neither VMEM tile needs a relayout/transpose before hitting the MXU.
    o_ref[...] = jnp.dot(yl_ref[...], ytr_ref[...],
                         preferred_element_type=jnp.float32)


def gram(y, yt, *, tm=None, tn=None):
    """out = y @ y.T, with yt == y.T supplied lane-dense as (K, M)."""
    M, K = y.shape
    assert yt.shape == (K, M), (yt.shape, (K, M))

    # Output-writeback bound (K is tiny): size tiles for lane-dense stores.
    if tm is None:
        tm = _pick_tile(M, (1024, 512, 256, 128, 64, 32, 16, 8), 8)
    if tn is None:
        tn = _pick_tile(M, (2048, 1024, 512, 256, 128), 128)
    # Correctness guard: never silently drop trailing rows/columns.
    assert M % tm == 0 and M % tn == 0, (M, tm, tn)
    grid = (M // tm, M // tn)

    # VMEM footprint with real lane/sublane padding:
    #   output (tm, tn) f32 double-buffered,
    #   LHS (tm, K=4) lane-pads to (tm, 128), double-buffered,
    #   RHS (K=4, tn) sublane-pads to (8, tn), double-buffered.
    needed = (2 * tm * tn * 4
              + 2 * tm * 128 * 4
              + 2 * 8 * max(tn, 128) * 4)
    cap = _vmem_cap_bytes()
    vmem_limit = int(min(max(needed + (8 << 20), 32 << 20), cap))
    vmem_limit = max(vmem_limit, needed + (4 << 20))

    return pl.pallas_call(
        _gram_kernel,
        out_shape=jax.ShapeDtypeStruct((M, M), jnp.float32),
        grid=grid,
        in_specs=[
            pl.BlockSpec((tm, K), lambda i, j: (i, 0)),   # y rows (LHS); constant over j
            pl.BlockSpec((K, tn), lambda i, j: (0, j)),   # yT cols (RHS); lane-dense slab
        ],
        out_specs=pl.BlockSpec((tm, tn), lambda i, j: (i, j)),
        compiler_params=pltpu.CompilerParams(
            dimension_semantics=("parallel", "parallel"),
            vmem_limit_bytes=vmem_limit),
    )(y, yt)


def model_forward(x, weight, dropout_scale, *, tm=None, tn=None):
    """x: (M, 3) f32, weight: (3, 4) f32, dropout_scale: (M, 4) f32 -> (M, M)."""
    # Tiny prologue (M x 4): let XLA fuse the matmul + dropout scale; the
    # dropout mask is therefore applied exactly once for both Gram operands.
    y = (jnp.dot(x, weight, preferred_element_type=jnp.float32)
         * dropout_scale).astype(jnp.float32)
    yt = y.T  # (K, M), lane-dense RHS for the Gram kernel
    return gram(y, yt, tm=tm, tn=tn)


if __name__ == "__main__":
    key = jax.random.PRNGKey(0)
    kx, kw, kd = jax.random.split(key, 3)

    # x must have last dim 3 so x @ weight(3, 4) is well-formed; M is kept
    # small but lane/sublane aligned so the tiled Gram path is exercised.
    M = 256
    x = jax.random.normal(kx, (M, 3), dtype=jnp.float32)
    weight = jax.random.normal(kw, (3, 4), dtype=jnp.float32)  # self.weight = torch.randn(3, 4)

    # nn.Dropout(p=0.5), training: keep w.p. 0.5, scale kept values by 2.0.
    keep = jax.random.bernoulli(kd, p=0.5, shape=(M, weight.shape[1]))
    dropout_scale = keep.astype(jnp.float32) * jnp.float32(2.0)

    fwd = jax.jit(model_forward)
    out = fwd(x, weight, dropout_scale)
    out = jax.block_until_ready(out)

    # Pure-JAX reference using the exact same dropout mask.
    y_ref = (x @ weight) * dropout_scale
    out_ref = y_ref @ y_ref.T

    assert out.shape == (M, M) and out.dtype == jnp.float32
    assert bool(jnp.allclose(out, out_ref, atol=1e-4, rtol=1e-4))
    assert bool(jnp.allclose(out, out.T, atol=1e-5))        # Gram symmetry
    assert bool(jnp.all(jnp.diag(out) >= -1e-6))

    print("KERNEL_OK")
</pallas_src>

<mosaic_0001>
module attributes {stable_mosaic.version = 11 : i64} {
  func.func @_gram_kernel(%arg0: i32, %arg1: i32, %arg2: memref<256x4xf32, #tpu.memory_space<vmem>>, %arg3: memref<4x256xf32, #tpu.memory_space<vmem>>, %arg4: memref<256x256xf32, #tpu.memory_space<vmem>>) attributes {dimension_semantics = [#tpu.dimension_semantics<parallel>, #tpu.dimension_semantics<parallel>], iteration_bounds = array<i64: 1, 1>, scalar_prefetch = 0 : i64, scratch_operands = 0 : i64, tpu.core_type = #tpu.core_type<tc>, window_params = [{transform_indices = @transform_0, window_bounds = array<i64: 256, 4>}, {transform_indices = @transform_1, window_bounds = array<i64: 4, 256>}, {transform_indices = @transform_2, window_bounds = array<i64: 256, 256>}]} {
    %c0 = arith.constant 0 : index
    %c0_0 = arith.constant 0 : index
    %0 = vector.load %arg2[%c0, %c0_0] : memref<256x4xf32, #tpu.memory_space<vmem>>, vector<256x4xf32>
    %c0_1 = arith.constant 0 : index
    %c0_2 = arith.constant 0 : index
    %1 = vector.load %arg3[%c0_1, %c0_2] : memref<4x256xf32, #tpu.memory_space<vmem>>, vector<4x256xf32>
    %cst = arith.constant dense<0.000000e+00> : vector<256x256xf32>
    %2 = tpu.matmul %0, %1, %cst {dimension_numbers = #tpu.dot_dimension_numbers<[1], [0], [0], [1], [0, 0, 1, 1], [], []>} : vector<256x4xf32>, vector<4x256xf32>, vector<256x256xf32> -> vector<256x256xf32>
    %c0_3 = arith.constant 0 : index
    %c0_4 = arith.constant 0 : index
    %3 = vector.load %arg4[%c0_3, %c0_4] : memref<256x256xf32, #tpu.memory_space<vmem>>, vector<256x256xf32>
    tpu.vector_store %arg4[%c0_3, %c0_4], %2 {strides = array<i32>} : memref<256x256xf32, #tpu.memory_space<vmem>>, vector<256x256xf32>,
    return
  }
  func.func @transform_0(%arg0: i32, %arg1: i32) -> (i32, i32) {
    %c0_i32 = arith.constant 0 : i32
    %c0_i32_0 = arith.constant 0 : i32
    return %arg0, %c0_i32 : i32, i32
  }
  func.func @transform_1(%arg0: i32, %arg1: i32) -> (i32, i32) {
    %c0_i32 = arith.constant 0 : i32
    %c0_i32_0 = arith.constant 0 : i32
    return %c0_i32, %arg1 : i32, i32
  }
  func.func @transform_2(%arg0: i32, %arg1: i32) -> (i32, i32) {
    %c0_i32 = arith.constant 0 : i32
    return %arg0, %arg1 : i32, i32
  }
}

</mosaic_0001>

<llo_original>
// kernel: model_forward.1
$region0: #{model_forward.1}
  #allocation0 [shape = 'u32[]', space=smem, size = 0x4, offset = 0x4, fixed_abs, tag = 'smem constant byte address 0x4 - core index']
  #allocation1 [shape = 'u32[144,128]{1,0:T(1,128)}', space=vmem, size = 0x12000, scoped, tag = 'internal scratch']
  %s0 = inlined_call_operand.vmem [shape: f32[256,4], index: 0, kind: input, shape index: {}]
  %s1 = inlined_call_operand.vmem [shape: f32[4,256], index: 1, kind: input, shape index: {}]
  %s2 = inlined_call_operand.hbm [shape: f32[256,256], index: 2, kind: output, shape index: {}]
  %s3 = sld [smem:[#allocation0]]
  $region18: #{model_forward.1} parent=0
    _
  %s5 = ssub.s32 1, %s3
  %s6 = scalar_select 0, %s5, %s3
  $region1: #{model_forward.1} parent=0
    #allocation2 [shape = 'u8[262144]{0}', space=vmem, size = 0x40000, scoped, tag = 'output window, operand 0, single buffered']
    #allocation3 [shape = 's32[1]{0}', space=sflag, size = 0x4, scoped, tag = 'scoped memory for model_forward.1']
    %7 = vsyncpa [#allocation3], 0
    // Predicated region
    $region2: #{model_forward.1} parent=1 // pred_check
      _
    $region3: #{model_forward.1} parent=1 // pred_check_branch
      %9 = sbr.rel (0) target = $region5
    $region4: #{model_forward.1} parent=1 // pred_region
      _
    $region5: #{model_forward.1} parent=1 // pred_fallthru
      _
    // Predicated region
    $region6: #{model_forward.1} parent=1 // pred_check
      _
    $region7: #{model_forward.1} parent=1 // pred_check_branch
      %11 = sbr.rel (0) target = $region9
    $region8: #{model_forward.1} parent=1 // pred_region
      _
    $region9: #{model_forward.1} parent=1 // pred_fallthru
      _
    %v12 = vld [vmem:[%s0] sm:$0xff]
    %v13 = vld [vmem:[%s0 + $0x8] sm:$0xff]
    %v14 = vld [vmem:[%s0 + $0x10] sm:$0xff]
    %v15 = vld [vmem:[%s0 + $0x18] sm:$0xff]
    %v16 = vld [vmem:[%s0 + $0x20] sm:$0xff]
    %v17 = vld [vmem:[%s0 + $0x28] sm:$0xff]
    %v18 = vld [vmem:[%s0 + $0x30] sm:$0xff]
    %v19 = vld [vmem:[%s0 + $0x38] sm:$0xff]
    %v20 = vld [vmem:[%s0 + $0x40] sm:$0xff]
    %v21 = vld [vmem:[%s0 + $0x48] sm:$0xff]
    %v22 = vld [vmem:[%s0 + $0x50] sm:$0xff]
    %v23 = vld [vmem:[%s0 + $0x58] sm:$0xff]
    %v24 = vld [vmem:[%s0 + $0x60] sm:$0xff]
    %v25 = vld [vmem:[%s0 + $0x68] sm:$0xff]
    %v26 = vld [vmem:[%s0 + $0x70] sm:$0xff]
    %v27 = vld [vmem:[%s0 + $0x78] sm:$0xff]
    %v28 = vld [vmem:[%s0 + $0x80] sm:$0xff]
    %v29 = vld [vmem:[%s0 + $0x88] sm:$0xff]
    %v30 = vld [vmem:[%s0 + $0x90] sm:$0xff]
    %v31 = vld [vmem:[%s0 + $0x98] sm:$0xff]
    %v32 = vld [vmem:[%s0 + $0xa0] sm:$0xff]
    %v33 = vld [vmem:[%s0 + $0xa8] sm:$0xff]
    %v34 = vld [vmem:[%s0 + $0xb0] sm:$0xff]
    %v35 = vld [vmem:[%s0 + $0xb8] sm:$0xff]
    %v36 = vld [vmem:[%s0 + $0xc0] sm:$0xff]
    %v37 = vld [vmem:[%s0 + $0xc8] sm:$0xff]
    %v38 = vld [vmem:[%s0 + $0xd0] sm:$0xff]
    %v39 = vld [vmem:[%s0 + $0xd8] sm:$0xff]
    %v40 = vld [vmem:[%s0 + $0xe0] sm:$0xff]
    %v41 = vld [vmem:[%s0 + $0xe8] sm:$0xff]
    %v42 = vld [vmem:[%s0 + $0xf0] sm:$0xff]
    %v43 = vld [vmem:[%s0 + $0xf8] sm:$0xff]
    %v44 = vld [vmem:[%s1] sm:$0xff]
    %v46 = vcombine.high %v44, %v44
    %vm47 = vcmask 31744
    %v49 = vsel %vm47, %v12, 0
    %v52 = vsel %vm47, %v13, 0
    %v55 = vsel %vm47, %v14, 0
    %v58 = vsel %vm47, %v15, 0
    %v61 = vsel %vm47, %v16, 0
    %v64 = vsel %vm47, %v17, 0
    %v67 = vsel %vm47, %v18, 0
    %v70 = vsel %vm47, %v19, 0
    %v73 = vsel %vm47, %v20, 0
    %v76 = vsel %vm47, %v21, 0
    %v79 = vsel %vm47, %v22, 0
    %v82 = vsel %vm47, %v23, 0
    %v85 = vsel %vm47, %v24, 0
    %v88 = vsel %vm47, %v25, 0
    %v91 = vsel %vm47, %v26, 0
    %v94 = vsel %vm47, %v27, 0
    %v97 = vsel %vm47, %v28, 0
    %v100 = vsel %vm47, %v29, 0
    %v103 = vsel %vm47, %v30, 0
    %v106 = vsel %vm47, %v31, 0
    %v109 = vsel %vm47, %v32, 0
    %v112 = vsel %vm47, %v33, 0
    %v115 = vsel %vm47, %v34, 0
    %v118 = vsel %vm47, %v35, 0
    %v121 = vsel %vm47, %v36, 0
    %v124 = vsel %vm47, %v37, 0
    %v127 = vsel %vm47, %v38, 0
    %v130 = vsel %vm47, %v39, 0
    %v133 = vsel %vm47, %v40, 0
    %v136 = vsel %vm47, %v41, 0
    %v139 = vsel %vm47, %v42, 0
    %v142 = vsel %vm47, %v43, 0
    %vm144 = vcmask 1043456
    %v145 = vsel %vm144, %v44, 0
    %v147 = vsel %vm144, %v46, 0
    %149 = vmatprep.subr.mxu0 %v147
    %150 = vmatpush1.msra.mxu0 %v145
    %151 = vmatprep.subr.mxu0 0.0
    %152 = vmatpush1.msra.mxu0 0.0
    %153 = vmatprep.subr.mxu0 0.0
    %154 = vmatpush1.msra.mxu0 0.0
    %155 = vmatprep.subr.mxu0 0.0
    %156 = vmatpush1.msra.mxu0 0.0
    %157 = vmatprep.subr.mxu0 0.0
    %158 = vmatpush1.msra.mxu0 0.0
    %159 = vmatprep.subr.mxu0 0.0
    %160 = vmatpush1.msra.mxu0 0.0
    %161 = vmatprep.subr.mxu0 0.0
    %162 = vmatpush1.msra.mxu0 0.0
    %163 = vmatprep.subr.mxu0 0.0
    %164 = vmatpush1.msra.mxu0 0.0
    %165 = vmatprep.subr.mxu0 0.0
    %166 = vmatpush1.msra.mxu0 0.0
    %167 = vmatprep.subr.mxu0 0.0
    %168 = vmatpush1.msra.mxu0 0.0
    %169 = vmatprep.subr.mxu0 0.0
    %170 = vmatpush1.msra.mxu0 0.0
    %171 = vmatprep.subr.mxu0 0.0
    %172 = vmatpush1.msra.mxu0 0.0
    %173 = vmatprep.subr.mxu0 0.0
    %174 = vmatpush1.msra.mxu0 0.0
    %175 = vmatprep.subr.mxu0 0.0
    %176 = vmatpush1.msra.mxu0 0.0
    %177 = vmatprep.subr.mxu0 0.0
    %178 = vmatpush1.msra.mxu0 0.0
    %179 = vmatprep.subr.mxu0 0.0
    %180 = vmatpush1.msra.mxu0 0.0
    %181 = vmatprep.subr.mxu0 0.0
    %182 = vmatpush1.msra.mxu0 0.0
    %183 = vmatprep.subr.mxu0 0.0
    %184 = vmatpush1.msra.mxu0 0.0
    %185 = vmatprep.subr.mxu0 0.0
    %186 = vmatpush1.msra.mxu0 0.0
    %187 = vmatprep.subr.mxu0 0.0
    %188 = vmatpush1.msra.mxu0 0.0
    %189 = vmatprep.subr.mxu0 0.0
    %190 = vmatpush1.msra.mxu0 0.0
    %191 = vmatprep.subr.mxu0 0.0
    %192 = vmatpush1.msra.mxu0 0.0
    %193 = vmatprep.subr.mxu0 0.0
    %194 = vmatpush1.msra.mxu0 0.0
    %195 = vmatprep.subr.mxu0 0.0
    %196 = vmatpush1.msra.mxu0 0.0
    %197 = vmatprep.subr.mxu0 0.0
    %198 = vmatpush1.msra.mxu0 0.0
    %199 = vmatprep.subr.mxu0 0.0
    %200 = vmatpush1.msra.mxu0 0.0
    %201 = vmatprep.subr.mxu0 0.0
    %202 = vmatpush1.msra.mxu0 0.0
    %203 = vmatprep.subr.mxu0 0.0
    %204 = vmatpush1.msra.mxu0 0.0
    %205 = vmatprep.subr.mxu0 0.0
    %206 = vmatpush1.msra.mxu0 0.0
    %207 = vmatprep.subr.mxu0 0.0
    %208 = vmatpush1.msra.mxu0 0.0
    %209 = vmatprep.subr.mxu0 0.0
    %210 = vmatpush1.msra.mxu0 0.0
    %211 = vmatprep.subr.mxu0 0.0
    %212 = vmatpush1.msra.mxu0 0.0
    %213 = vmatprep.mubr.f32.mxu0 0.0
    %214 = vmatmul.mubr.f32.gmra.mrb[0].mxu0 %v49
    %v215 = vpop.f32.mrb[0].mxu0
    %v216 = vadd.f32 0.0, %v215
    %v217 = vpop.f32.mrb[0].mxu0
    %v218 = vadd.f32 0.0, %v217
    %219 = vmatprep.mubr.f32.mxu0 0.0
    %220 = vmatmul.mubr.f32.gmra.mrb[0].mxu0 %v52
    %v221 = vpop.f32.mrb[0].mxu0
    %v222 = vadd.f32 0.0, %v221
    %v223 = vpop.f32.mrb[0].mxu0
    %v224 = vadd.f32 0.0, %v223
    %225 = vmatprep.mubr.f32.mxu0 0.0
    %226 = vmatmul.mubr.f32.gmra.mrb[0].mxu0 %v55
    %v227 = vpop.f32.mrb[0].mxu0
    %v228 = vadd.f32 0.0, %v227
    %v229 = vpop.f32.mrb[0].mxu0
    %v230 = vadd.f32 0.0, %v229
    %231 = vmatprep.mubr.f32.mxu0 0.0
    %232 = vmatmul.mubr.f32.gmra.mrb[0].mxu0 %v58
    %v233 = vpop.f32.mrb[0].mxu0
    %v234 = vadd.f32 0.0, %v233
    %v235 = vpop.f32.mrb[0].mxu0
    %v236 = vadd.f32 0.0, %v235
    %237 = vmatprep.mubr.f32.mxu0 0.0
    %238 = vmatmul.mubr.f32.gmra.mrb[0].mxu0 %v61
    %v239 = vpop.f32.mrb[0].mxu0
    %v240 = vadd.f32 0.0, %v239
    %v241 = vpop.f32.mrb[0].mxu0
    %v242 = vadd.f32 0.0, %v241
    %243 = vmatprep.mubr.f32.mxu0 0.0
    %244 = vmatmul.mubr.f32.gmra.mrb[0].mxu0 %v64
    %v245 = vpop.f32.mrb[0].mxu0
    %v246 = vadd.f32 0.0, %v245
    %v247 = vpop.f32.mrb[0].mxu0
    %v248 = vadd.f32 0.0, %v247
    %249 = vmatprep.mubr.f32.mxu0 0.0
    %250 = vmatmul.mubr.f32.gmra.mrb[0].mxu0 %v67
    %v251 = vpop.f32.mrb[0].mxu0
    %v252 = vadd.f32 0.0, %v251
    %v253 = vpop.f32.mrb[0].mxu0
    %v254 = vadd.f32 0.0, %v253
    %255 = vmatprep.mubr.f32.mxu0 0.0
    %256 = vmatmul.mubr.f32.gmra.mrb[0].mxu0 %v70
    %v257 = vpop.f32.mrb[0].mxu0
    %v258 = vadd.f32 0.0, %v257
    %v259 = vpop.f32.mrb[0].mxu0
    %v260 = vadd.f32 0.0, %v259
    %261 = vmatprep.mubr.f32.mxu0 0.0
    %262 = vmatmul.mubr.f32.gmra.mrb[0].mxu0 %v73
    %v263 = vpop.f32.mrb[0].mxu0
    %v264 = vadd.f32 0.0, %v263
    %v265 = vpop.f32.mrb[0].mxu0
    %v266 = vadd.f32 0.0, %v265
    %267 = vmatprep.mubr.f32.mxu0 0.0
    %268 = vmatmul.mubr.f32.gmra.mrb[0].mxu0 %v76
    %v269 = vpop.f32.mrb[0].mxu0
    %v270 = vadd.f32 0.0, %v269
    %v271 = vpop.f32.mrb[0].mxu0
    %v272 = vadd.f32 0.0, %v271
    %273 = vmatprep.mubr.f32.mxu0 0.0
    %274 = vmatmul.mubr.f32.gmra.mrb[0].mxu0 %v79
    %v275 = vpop.f32.mrb[0].mxu0
    %v276 = vadd.f32 0.0, %v275
    %v277 = vpop.f32.mrb[0].mxu0
    %v278 = vadd.f32 0.0, %v277
    %279 = vmatprep.mubr.f32.mxu0 0.0
    %280 = vmatmul.mubr.f32.gmra.mrb[0].mxu0 %v82
    %v281 = vpop.f32.mrb[0].mxu0
    %v282 = vadd.f32 0.0, %v281
    %v283 = vpop.f32.mrb[0].mxu0
    %v284 = vadd.f32 0.0, %v283
    %285 = vmatprep.mubr.f32.mxu0 0.0
    %286 = vmatmul.mubr.f32.gmra.mrb[0].mxu0 %v85
    %v287 = vpop.f32.mrb[0].mxu0
    %v288 = vadd.f32 0.0, %v287
    %v289 = vpop.f32.mrb[0].mxu0
    %v290 = vadd.f32 0.0, %v289
    %291 = vmatprep.mubr.f32.mxu0 0.0
    %292 = vmatmul.mubr.f32.gmra.mrb[0].mxu0 %v88
    %v293 = vpop.f32.mrb[0].mxu0
    %v294 = vadd.f32 0.0, %v293
    %v295 = vpop.f32.mrb[0].mxu0
    %v296 = vadd.f32 0.0, %v295
    %297 = vmatprep.mubr.f32.mxu0 0.0
    %298 = vmatmul.mubr.f32.gmra.mrb[0].mxu0 %v91
    %v299 = vpop.f32.mrb[0].mxu0
    %v300 = vadd.f32 0.0, %v299
    %v301 = vpop.f32.mrb[0].mxu0
    %v302 = vadd.f32 0.0, %v301
    %303 = vmatprep.mubr.f32.mxu0 0.0
    %304 = vmatmul.mubr.f32.gmra.mrb[0].mxu0 %v94
    %v305 = vpop.f32.mrb[0].mxu0
    %v306 = vadd.f32 0.0, %v305
    %v307 = vpop.f32.mrb[0].mxu0
    %v308 = vadd.f32 0.0, %v307
    %309 = vmatprep.mubr.f32.mxu0 0.0
    %310 = vmatmul.mubr.f32.gmra.mrb[0].mxu0 %v97
    %v311 = vpop.f32.mrb[0].mxu0
    %v312 = vadd.f32 0.0, %v311
    %v313 = vpop.f32.mrb[0].mxu0
    %v314 = vadd.f32 0.0, %v313
    %315 = vmatprep.mubr.f32.mxu0 0.0
    %316 = vmatmul.mubr.f32.gmra.mrb[0].mxu0 %v100
    %v317 = vpop.f32.mrb[0].mxu0
    %v318 = vadd.f32 0.0, %v317
    %v319 = vpop.f32.mrb[0].mxu0
    %v320 = vadd.f32 0.0, %v319
    %321 = vmatprep.mubr.f32.mxu0 0.0
    %322 = vmatmul.mubr.f32.gmra.mrb[0].mxu0 %v103
    %v323 = vpop.f32.mrb[0].mxu0
    %v324 = vadd.f32 0.0, %v323
    %v325 = vpop.f32.mrb[0].mxu0
    %v326 = vadd.f32 0.0, %v325
    %327 = vmatprep.mubr.f32.mxu0 0.0
    %328 = vmatmul.mubr.f32.gmra.mrb[0].mxu0 %v106
    %v329 = vpop.f32.mrb[0].mxu0
    %v330 = vadd.f32 0.0, %v329
    %v331 = vpop.f32.mrb[0].mxu0
    %v332 = vadd.f32 0.0, %v331
    %333 = vmatprep.mubr.f32.mxu0 0.0
    %334 = vmatmul.mubr.f32.gmra.mrb[0].mxu0 %v109
    %v335 = vpop.f32.mrb[0].mxu0
    %v336 = vadd.f32 0.0, %v335
    %v337 = vpop.f32.mrb[0].mxu0
    %v338 = vadd.f32 0.0, %v337
    %339 = vmatprep.mubr.f32.mxu0 0.0
    %340 = vmatmul.mubr.f32.gmra.mrb[0].mxu0 %v112
    %v341 = vpop.f32.mrb[0].mxu0
    %v342 = vadd.f32 0.0, %v341
    %v343 = vpop.f32.mrb[0].mxu0
    %v344 = vadd.f32 0.0, %v343
    %345 = vmatprep.mubr.f32.mxu0 0.0
    %346 = vmatmul.mubr.f32.gmra.mrb[0].mxu0 %v115
    %v347 = vpop.f32.mrb[0].mxu0
    %v348 = vadd.f32 0.0, %v347
    %v349 = vpop.f32.mrb[0].mxu0
    %v350 = vadd.f32 0.0, %v349
    %351 = vmatprep.mubr.f32.mxu0 0.0
    %352 = vmatmul.mubr.f32.gmra.mrb[0].mxu0 %v118
    %v353 = vpop.f32.mrb[0].mxu0
    %v354 = vadd.f32 0.0, %v353
    %v355 = vpop.f32.mrb[0].mxu0
    %v356 = vadd.f32 0.0, %v355
    %357 = vmatprep.mubr.f32.mxu0 0.0
    %358 = vmatmul.mubr.f32.gmra.mrb[0].mxu0 %v121
    %v359 = vpop.f32.mrb[0].mxu0
    %v360 = vadd.f32 0.0, %v359
    %v361 = vpop.f32.mrb[0].mxu0
    %v362 = vadd.f32 0.0, %v361
    %363 = vmatprep.mubr.f32.mxu0 0.0
    %364 = vmatmul.mubr.f32.gmra.mrb[0].mxu0 %v124
    %v365 = vpop.f32.mrb[0].mxu0
    %v366 = vadd.f32 0.0, %v365
    %v367 = vpop.f32.mrb[0].mxu0
    %v368 = vadd.f32 0.0, %v367
    %369 = vmatprep.mubr.f32.mxu0 0.0
    %370 = vmatmul.mubr.f32.gmra.mrb[0].mxu0 %v127
    %v371 = vpop.f32.mrb[0].mxu0
    %v372 = vadd.f32 0.0, %v371
    %v373 = vpop.f32.mrb[0].mxu0
    %v374 = vadd.f32 0.0, %v373
    %375 = vmatprep.mubr.f32.mxu0 0.0
    %376 = vmatmul.mubr.f32.gmra.mrb[0].mxu0 %v130
    %v377 = vpop.f32.mrb[0].mxu0
    %v378 = vadd.f32 0.0, %v377
    %v379 = vpop.f32.mrb[0].mxu0
    %v380 = vadd.f32 0.0, %v379
    %381 = vmatprep.mubr.f32.mxu0 0.0
    %382 = vmatmul.mubr.f32.gmra.mrb[0].mxu0 %v133
    %v383 = vpop.f32.mrb[0].mxu0
    %v384 = vadd.f32 0.0, %v383
    %v385 = vpop.f32.mrb[0].mxu0
    %v386 = vadd.f32 0.0, %v385
    %387 = vmatprep.mubr.f32.mxu0 0.0
    %388 = vmatmul.mubr.f32.gmra.mrb[0].mxu0 %v136
    %v389 = vpop.f32.mrb[0].mxu0
    %v390 = vadd.f32 0.0, %v389
    %v391 = vpop.f32.mrb[0].mxu0
    %v392 = vadd.f32 0.0, %v391
    %393 = vmatprep.mubr.f32.mxu0 0.0
    %394 = vmatmul.mubr.f32.gmra.mrb[0].mxu0 %v139
    %v395 = vpop.f32.mrb[0].mxu0
    %v396 = vadd.f32 0.0, %v395
    %v397 = vpop.f32.mrb[0].mxu0
    %v398 = vadd.f32 0.0, %v397
    %399 = vmatprep.mubr.f32.mxu0 0.0
    %400 = vmatmul.mubr.f32.gmra.mrb[0].mxu0 %v142
    %v401 = vpop.f32.mrb[0].mxu0
    %v402 = vadd.f32 0.0, %v401
    %v403 = vpop.f32.mrb[0].mxu0
    %v404 = vadd.f32 0.0, %v403
    %405 = vdwg.mxu0
    %406 = vst [vmem:[#allocation2] sm:$0xff] %v216
    %407 = vst [vmem:[#allocation2 + $0x8] sm:$0xff] %v218
    %408 = vst [vmem:[#allocation2 + $0x10] sm:$0xff] %v222
    %409 = vst [vmem:[#allocation2 + $0x18] sm:$0xff] %v224
    %410 = vst [vmem:[#allocation2 + $0x20] sm:$0xff] %v228
    %411 = vst [vmem:[#allocation2 + $0x28] sm:$0xff] %v230
    %412 = vst [vmem:[#allocation2 + $0x30] sm:$0xff] %v234
    %413 = vst [vmem:[#allocation2 + $0x38] sm:$0xff] %v236
    %414 = vst [vmem:[#allocation2 + $0x40] sm:$0xff] %v240
    %415 = vst [vmem:[#allocation2 + $0x48] sm:$0xff] %v242
    %416 = vst [vmem:[#allocation2 + $0x50] sm:$0xff] %v246
    %417 = vst [vmem:[#allocation2 + $0x58] sm:$0xff] %v248
    %418 = vst [vmem:[#allocation2 + $0x60] sm:$0xff] %v252
    %419 = vst [vmem:[#allocation2 + $0x68] sm:$0xff] %v254
    %420 = vst [vmem:[#allocation2 + $0x70] sm:$0xff] %v258
    %421 = vst [vmem:[#allocation2 + $0x78] sm:$0xff] %v260
    %422 = vst [vmem:[#allocation2 + $0x80] sm:$0xff] %v264
    %423 = vst [vmem:[#allocation2 + $0x88] sm:$0xff] %v266
    %424 = vst [vmem:[#allocation2 + $0x90] sm:$0xff] %v270
    %425 = vst [vmem:[#allocation2 + $0x98] sm:$0xff] %v272
    %426 = vst [vmem:[#allocation2 + $0xa0] sm:$0xff] %v276
    %427 = vst [vmem:[#allocation2 + $0xa8] sm:$0xff] %v278
    %428 = vst [vmem:[#allocation2 + $0xb0] sm:$0xff] %v282
    %429 = vst [vmem:[#allocation2 + $0xb8] sm:$0xff] %v284
    %430 = vst [vmem:[#allocation2 + $0xc0] sm:$0xff] %v288
    %431 = vst [vmem:[#allocation2 + $0xc8] sm:$0xff] %v290
    %432 = vst [vmem:[#allocation2 + $0xd0] sm:$0xff] %v294
    %433 = vst [vmem:[#allocation2 + $0xd8] sm:$0xff] %v296
    %434 = vst [vmem:[#allocation2 + $0xe0] sm:$0xff] %v300
    %435 = vst [vmem:[#allocation2 + $0xe8] sm:$0xff] %v302
    %436 = vst [vmem:[#allocation2 + $0xf0] sm:$0xff] %v306
    %437 = vst [vmem:[#allocation2 + $0xf8] sm:$0xff] %v308
    %438 = vst [vmem:[#allocation2 + $0x100] sm:$0xff] %v312
    %439 = vst [vmem:[#allocation2 + $0x108] sm:$0xff] %v314
    %440 = vst [vmem:[#allocation2 + $0x110] sm:$0xff] %v318
    %441 = vst [vmem:[#allocation2 + $0x118] sm:$0xff] %v320
    %442 = vst [vmem:[#allocation2 + $0x120] sm:$0xff] %v324
    %443 = vst [vmem:[#allocation2 + $0x128] sm:$0xff] %v326
    %444 = vst [vmem:[#allocation2 + $0x130] sm:$0xff] %v330
    %445 = vst [vmem:[#allocation2 + $0x138] sm:$0xff] %v332
    %446 = vst [vmem:[#allocation2 + $0x140] sm:$0xff] %v336
    %447 = vst [vmem:[#allocation2 + $0x148] sm:$0xff] %v338
    %448 = vst [vmem:[#allocation2 + $0x150] sm:$0xff] %v342
    %449 = vst [vmem:[#allocation2 + $0x158] sm:$0xff] %v344
    %450 = vst [vmem:[#allocation2 + $0x160] sm:$0xff] %v348
    %451 = vst [vmem:[#allocation2 + $0x168] sm:$0xff] %v350
    %452 = vst [vmem:[#allocation2 + $0x170] sm:$0xff] %v354
    %453 = vst [vmem:[#allocation2 + $0x178] sm:$0xff] %v356
    %454 = vst [vmem:[#allocation2 + $0x180] sm:$0xff] %v360
    %455 = vst [vmem:[#allocation2 + $0x188] sm:$0xff] %v362
    %456 = vst [vmem:[#allocation2 + $0x190] sm:$0xff] %v366
    %457 = vst [vmem:[#allocation2 + $0x198] sm:$0xff] %v368
    %458 = vst [vmem:[#allocation2 + $0x1a0] sm:$0xff] %v372
    %459 = vst [vmem:[#allocation2 + $0x1a8] sm:$0xff] %v374
    %460 = vst [vmem:[#allocation2 + $0x1b0] sm:$0xff] %v378
    %461 = vst [vmem:[#allocation2 + $0x1b8] sm:$0xff] %v380
    %462 = vst [vmem:[#allocation2 + $0x1c0] sm:$0xff] %v384
    %463 = vst [vmem:[#allocation2 + $0x1c8] sm:$0xff] %v386
    %464 = vst [vmem:[#allocation2 + $0x1d0] sm:$0xff] %v390
    %465 = vst [vmem:[#allocation2 + $0x1d8] sm:$0xff] %v392
    %466 = vst [vmem:[#allocation2 + $0x1e0] sm:$0xff] %v396
    %467 = vst [vmem:[#allocation2 + $0x1e8] sm:$0xff] %v398
    %468 = vst [vmem:[#allocation2 + $0x1f0] sm:$0xff] %v402
    %469 = vst [vmem:[#allocation2 + $0x1f8] sm:$0xff] %v404
    // Predicated region
    $region10: #{model_forward.1} parent=1 // pred_check
      _
    $region11: #{model_forward.1} parent=1 // pred_check_branch
      %471 = sbr.rel (0) target = $region13
    $region12: #{model_forward.1} parent=1 // pred_region
      %s473 = ssub.s32 8192, 8192
      %474 = vsyncadd [#allocation3], %s473
      %s475 = sshll.u32 [#allocation2], 4
      %s476 = int_to_ptr.vmem [resolvable:$true] %s475
      %481 = dma.vmem_to_hbm [thread:$0]  %s476, 8192, %s2, [#allocation3], 256, 256, 16
    $region13: #{model_forward.1} parent=1 // pred_fallthru
      _
    // Predicated region
    $region14: #{model_forward.1} parent=1 // pred_check
      _
    $region15: #{model_forward.1} parent=1 // pred_check_branch
      %483 = sbr.rel (0) target = $region17
    $region16: #{model_forward.1} parent=1 // pred_region
      %484 = dma.done [#allocation3], 8192
    $region17: #{model_forward.1} parent=1 // pred_fallthru
      _
    %485 = vsyncpa [#allocation3], 1

</llo_original>
